<compile_context>
chip_gen: v6e
topology: v6e:2x2x1
jax: 0.10.0
libtpu: 0.0.40
codegen_flags: <defaults>
</compile_context>

<pallas_src>
import functools

import jax
import jax.numpy as jnp
from jax.experimental import pallas as pl
from jax.experimental.pallas import tpu as pltpu


def _round_up(n, m):
    return ((n + m - 1) // m) * m


def _decoder_kernel(x_ref, *rest):
    """Fused MLP decoder: (Linear+ReLU)^n  ->  Linear -> Sigmoid.

    rest = (w0, b0, w1, b1, ..., w_rec, b_rec, out_ref); layer count is static
    at trace time, so the Python loop fully unrolls into one kernel body.
    """
    out_ref = rest[-1]
    param_refs = rest[:-1]
    num_layers = len(param_refs) // 2

    h = x_ref[...].astype(jnp.float32)
    for li in range(num_layers):
        w_ref = param_refs[2 * li]
        b_ref = param_refs[2 * li + 1]
        # Cast activations to the weight dtype (no-op for f32 weights) so bf16
        # weights use the bf16 MXU path; accumulate in f32.
        acc = jnp.dot(h.astype(w_ref.dtype), w_ref[...],
                      preferred_element_type=jnp.float32)
        acc = acc + b_ref[...].astype(jnp.float32)
        if li < num_layers - 1:
            h = jnp.maximum(acc, 0.0)                       # ReLU (VPU)
        else:
            # Sigmoid output activation (EUP exp + reciprocal), f32 store.
            out_ref[...] = (1.0 / (1.0 + jnp.exp(-acc))).astype(out_ref.dtype)


def decoder_forward(x, params, *, block_b=128, param_dtype=None,
                    vmem_limit_bytes=None):
    """Run the fused decoder.

    x:      [B, z_dim] float32
    params: list of (w, b) pairs, w: [in, out], b: [out] or [1, out];
            hidden layers first, reconstruction layer last.
    """
    B, z_dim = x.shape
    dims = [z_dim] + [w.shape[1] for (w, _b) in params]
    # Lane-dense feature dims: pad everything to a multiple of 128.
    pdims = [_round_up(d, 128) for d in dims]

    # Batch tiling: tile rows are a multiple of 8 (sublane), grid is parallel.
    block_b = max(8, min(block_b, _round_up(B, 8)))
    block_b = _round_up(block_b, 8)
    b_pad = _round_up(B, block_b)
    grid = (b_pad // block_b,)

    x_p = jnp.pad(x.astype(jnp.float32),
                  ((0, b_pad - B), (0, pdims[0] - dims[0])))

    flat_params = []
    in_specs = [pl.BlockSpec((block_b, pdims[0]), lambda i: (i, 0))]
    for li, (w, b) in enumerate(params):
        p_in, p_out = pdims[li], pdims[li + 1]
        w_p = jnp.pad(w, ((0, p_in - w.shape[0]), (0, p_out - w.shape[1])))
        b_row = b.reshape(1, -1)
        b_p = jnp.pad(b_row, ((0, 0), (0, p_out - b_row.shape[-1])))
        if param_dtype is not None:
            w_p = w_p.astype(param_dtype)
            b_p = b_p.astype(param_dtype)
        flat_params += [w_p, b_p]
        # Constant index maps -> weights/biases stay resident in VMEM across
        # all batch tiles (no per-tile re-DMA).
        in_specs += [pl.BlockSpec((p_in, p_out), lambda i: (0, 0)),
                     pl.BlockSpec((1, p_out), lambda i: (0, 0))]

    out_p = pdims[-1]
    out_spec = pl.BlockSpec((block_b, out_p), lambda i: (i, 0))

    y_pad = pl.pallas_call(
        _decoder_kernel,
        out_shape=jax.ShapeDtypeStruct((b_pad, out_p), jnp.float32),
        grid=grid,
        in_specs=in_specs,
        out_specs=out_spec,
        compiler_params=pltpu.CompilerParams(
            dimension_semantics=("parallel",),   # batch tiles are independent
            vmem_limit_bytes=vmem_limit_bytes,
        ),
    )(x_p, *flat_params)

    # Strip batch and lane padding.
    return y_pad[:B, :dims[-1]]


def init_params(key, z_dim, h_dims, x_dim, dtype=jnp.float32):
    """nn.Linear-style init; weights stored [in, out] so kernel does x @ W + b."""
    sizes = [z_dim, *h_dims, x_dim]
    params = []
    keys = jax.random.split(key, 2 * (len(sizes) - 1))
    for i in range(1, len(sizes)):
        fan_in, fan_out = sizes[i - 1], sizes[i]
        bound = 1.0 / jnp.sqrt(jnp.float32(fan_in))
        w = jax.random.uniform(keys[2 * (i - 1)], (fan_in, fan_out),
                               jnp.float32, -bound, bound).astype(dtype)
        b = jax.random.uniform(keys[2 * (i - 1) + 1], (1, fan_out),
                               jnp.float32, -bound, bound).astype(dtype)
        params.append((w, b))
    return params


if __name__ == "__main__":
    # Small shapes consistent with Decoder(dims=[z_dim, [h1, h2], x_dim]).
    B = 48
    Z_DIM, H_DIMS, X_DIM = 16, (32, 64), 100

    key = jax.random.PRNGKey(0)
    kx, kp = jax.random.split(key)
    x = jax.random.normal(kx, (B, Z_DIM), jnp.float32)
    params = init_params(kp, Z_DIM, H_DIMS, X_DIM)

    # Use a small batch tile here so the demo actually exercises a multi-step
    # parallel grid (3 tiles of 16 rows); default block_b=128 for real sizes.
    y = decoder_forward(x, params, block_b=16)
    jax.block_until_ready(y)
    assert y.shape == (B, X_DIM)

    # Pure-JAX reference (highest precision so f32 MXU paths match closely).
    dot = functools.partial(jnp.dot, precision=jax.lax.Precision.HIGHEST)
    ref = x
    for (w, b) in params[:-1]:
        ref = jnp.maximum(dot(ref, w) + b, 0.0)
    w_rec, b_rec = params[-1]
    ref = jax.nn.sigmoid(dot(ref, w_rec) + b_rec)

    assert jnp.allclose(y, ref, atol=5e-4, rtol=1e-3), (
        float(jnp.max(jnp.abs(y - ref))))

    print("KERNEL_OK")
</pallas_src>

<mosaic_0001>
module attributes {stable_mosaic.version = 11 : i64} {
  func.func @_decoder_kernel(%arg0: i32, %arg1: memref<16x128xf32, #tpu.memory_space<vmem>>, %arg2: memref<128x128xf32, #tpu.memory_space<vmem>>, %arg3: memref<1x128xf32, #tpu.memory_space<vmem>>, %arg4: memref<128x128xf32, #tpu.memory_space<vmem>>, %arg5: memref<1x128xf32, #tpu.memory_space<vmem>>, %arg6: memref<128x128xf32, #tpu.memory_space<vmem>>, %arg7: memref<1x128xf32, #tpu.memory_space<vmem>>, %arg8: memref<16x128xf32, #tpu.memory_space<vmem>>) attributes {dimension_semantics = [#tpu.dimension_semantics<parallel>], iteration_bounds = array<i64: 3>, scalar_prefetch = 0 : i64, scratch_operands = 0 : i64, tpu.core_type = #tpu.core_type<tc>, window_params = [{transform_indices = @transform_0, window_bounds = array<i64: 16, 128>}, {pipeline_mode = #tpu.pipeline_mode<synchronous>, transform_indices = @transform_1, window_bounds = array<i64: 128, 128>}, {pipeline_mode = #tpu.pipeline_mode<synchronous>, transform_indices = @transform_2, window_bounds = array<i64: 1, 128>}, {pipeline_mode = #tpu.pipeline_mode<synchronous>, transform_indices = @transform_3, window_bounds = array<i64: 128, 128>}, {pipeline_mode = #tpu.pipeline_mode<synchronous>, transform_indices = @transform_4, window_bounds = array<i64: 1, 128>}, {pipeline_mode = #tpu.pipeline_mode<synchronous>, transform_indices = @transform_5, window_bounds = array<i64: 128, 128>}, {pipeline_mode = #tpu.pipeline_mode<synchronous>, transform_indices = @transform_6, window_bounds = array<i64: 1, 128>}, {transform_indices = @transform_7, window_bounds = array<i64: 16, 128>}]} {
    %c0 = arith.constant 0 : index
    %c0_0 = arith.constant 0 : index
    %0 = vector.load %arg1[%c0, %c0_0] : memref<16x128xf32, #tpu.memory_space<vmem>>, vector<16x128xf32>
    %c0_1 = arith.constant 0 : index
    %c0_2 = arith.constant 0 : index
    %1 = vector.load %arg2[%c0_1, %c0_2] : memref<128x128xf32, #tpu.memory_space<vmem>>, vector<128x128xf32>
    %cst = arith.constant dense<0.000000e+00> : vector<16x128xf32>
    %2 = tpu.matmul %0, %1, %cst {dimension_numbers = #tpu.dot_dimension_numbers<[1], [0], [0], [1], [0, 0, 1, 1], [], []>} : vector<16x128xf32>, vector<128x128xf32>, vector<16x128xf32> -> vector<16x128xf32>
    %c0_3 = arith.constant 0 : index
    %c0_4 = arith.constant 0 : index
    %3 = vector.load %arg3[%c0_3, %c0_4] : memref<1x128xf32, #tpu.memory_space<vmem>>, vector<1x128xf32>
    %4 = vector.broadcast %3 : vector<1x128xf32> to vector<16x128xf32>
    %5 = arith.addf %2, %4 : vector<16x128xf32>
    %cst_5 = arith.constant 0.000000e+00 : f32
    %6 = vector.broadcast %cst_5 : f32 to vector<16x128xf32>
    %7 = arith.maximumf %5, %6 : vector<16x128xf32>
    %c0_6 = arith.constant 0 : index
    %c0_7 = arith.constant 0 : index
    %8 = vector.load %arg4[%c0_6, %c0_7] : memref<128x128xf32, #tpu.memory_space<vmem>>, vector<128x128xf32>
    %cst_8 = arith.constant dense<0.000000e+00> : vector<16x128xf32>
    %9 = tpu.matmul %7, %8, %cst_8 {dimension_numbers = #tpu.dot_dimension_numbers<[1], [0], [0], [1], [0, 0, 1, 1], [], []>} : vector<16x128xf32>, vector<128x128xf32>, vector<16x128xf32> -> vector<16x128xf32>
    %c0_9 = arith.constant 0 : index
    %c0_10 = arith.constant 0 : index
    %10 = vector.load %arg5[%c0_9, %c0_10] : memref<1x128xf32, #tpu.memory_space<vmem>>, vector<1x128xf32>
    %11 = vector.broadcast %10 : vector<1x128xf32> to vector<16x128xf32>
    %12 = arith.addf %9, %11 : vector<16x128xf32>
    %cst_11 = arith.constant 0.000000e+00 : f32
    %13 = vector.broadcast %cst_11 : f32 to vector<16x128xf32>
    %14 = arith.maximumf %12, %13 : vector<16x128xf32>
    %c0_12 = arith.constant 0 : index
    %c0_13 = arith.constant 0 : index
    %15 = vector.load %arg6[%c0_12, %c0_13] : memref<128x128xf32, #tpu.memory_space<vmem>>, vector<128x128xf32>
    %cst_14 = arith.constant dense<0.000000e+00> : vector<16x128xf32>
    %16 = tpu.matmul %14, %15, %cst_14 {dimension_numbers = #tpu.dot_dimension_numbers<[1], [0], [0], [1], [0, 0, 1, 1], [], []>} : vector<16x128xf32>, vector<128x128xf32>, vector<16x128xf32> -> vector<16x128xf32>
    %c0_15 = arith.constant 0 : index
    %c0_16 = arith.constant 0 : index
    %17 = vector.load %arg7[%c0_15, %c0_16] : memref<1x128xf32, #tpu.memory_space<vmem>>, vector<1x128xf32>
    %18 = vector.broadcast %17 : vector<1x128xf32> to vector<16x128xf32>
    %19 = arith.addf %16, %18 : vector<16x128xf32>
    %cst_17 = arith.constant 0.000000e+00 : f32
    %20 = vector.broadcast %cst_17 : f32 to vector<16x128xf32>
    %21 = arith.subf %20, %19 : vector<16x128xf32>
    %22 = math.exp %21 : vector<16x128xf32>
    %cst_18 = arith.constant 1.000000e+00 : f32
    %23 = vector.broadcast %cst_18 : f32 to vector<16x128xf32>
    %24 = arith.addf %23, %22 : vector<16x128xf32>
    %cst_19 = arith.constant 1.000000e+00 : f32
    %25 = vector.broadcast %cst_19 : f32 to vector<16x128xf32>
    %26 = arith.divf %25, %24 : vector<16x128xf32>
    %c0_20 = arith.constant 0 : index
    %c0_21 = arith.constant 0 : index
    %27 = vector.load %arg8[%c0_20, %c0_21] : memref<16x128xf32, #tpu.memory_space<vmem>>, vector<16x128xf32>
    tpu.vector_store %arg8[%c0_20, %c0_21], %26 {strides = array<i32>} : memref<16x128xf32, #tpu.memory_space<vmem>>, vector<16x128xf32>,
    return
  }
  func.func @transform_0(%arg0: i32) -> (i32, i32) {
    %c0_i32 = arith.constant 0 : i32
    %c0_i32_0 = arith.constant 0 : i32
    return %arg0, %c0_i32 : i32, i32
  }
  func.func @transform_1(%arg0: i32) -> (i32, i32) {
    %c0_i32 = arith.constant 0 : i32
    %c0_i32_0 = arith.constant 0 : i32
    %c0_i32_1 = arith.constant 0 : i32
    return %c0_i32, %c0_i32_0 : i32, i32
  }
  func.func @transform_2(%arg0: i32) -> (i32, i32) {
    %c0_i32 = arith.constant 0 : i32
    %c0_i32_0 = arith.constant 0 : i32
    %c0_i32_1 = arith.constant 0 : i32
    return %c0_i32, %c0_i32_0 : i32, i32
  }
  func.func @transform_3(%arg0: i32) -> (i32, i32) {
    %c0_i32 = arith.constant 0 : i32
    %c0_i32_0 = arith.constant 0 : i32
    %c0_i32_1 = arith.constant 0 : i32
    return %c0_i32, %c0_i32_0 : i32, i32
  }
  func.func @transform_4(%arg0: i32) -> (i32, i32) {
    %c0_i32 = arith.constant 0 : i32
    %c0_i32_0 = arith.constant 0 : i32
    %c0_i32_1 = arith.constant 0 : i32
    return %c0_i32, %c0_i32_0 : i32, i32
  }
  func.func @transform_5(%arg0: i32) -> (i32, i32) {
    %c0_i32 = arith.constant 0 : i32
    %c0_i32_0 = arith.constant 0 : i32
    %c0_i32_1 = arith.constant 0 : i32
    return %c0_i32, %c0_i32_0 : i32, i32
  }
  func.func @transform_6(%arg0: i32) -> (i32, i32) {
    %c0_i32 = arith.constant 0 : i32
    %c0_i32_0 = arith.constant 0 : i32
    %c0_i32_1 = arith.constant 0 : i32
    return %c0_i32, %c0_i32_0 : i32, i32
  }
  func.func @transform_7(%arg0: i32) -> (i32, i32) {
    %c0_i32 = arith.constant 0 : i32
    %c0_i32_0 = arith.constant 0 : i32
    return %arg0, %c0_i32 : i32, i32
  }
}

</mosaic_0001>

<llo_original>
// kernel: tpu_custom_call.1
$region0: #{tpu_custom_call.1}
  #allocation0 [shape = 'u32[]', space=smem, size = 0x4, offset = 0x4, fixed_abs, tag = 'smem constant byte address 0x4 - core index']
  #allocation1 [shape = 'u32[144,128]{1,0:T(1,128)}', space=vmem, size = 0x12000, scoped, tag = 'internal scratch']
  %s0 = inlined_call_operand.hbm [shape: f32[48,128], index: 0, kind: input, shape index: {}]
  %s1 = inlined_call_operand.hbm [shape: f32[128,128], index: 1, kind: input, shape index: {}]
  %s2 = inlined_call_operand.vmem [shape: f32[1,128], index: 2, kind: input, shape index: {}]
  %s3 = inlined_call_operand.hbm [shape: f32[128,128], index: 3, kind: input, shape index: {}]
  %s4 = inlined_call_operand.vmem [shape: f32[1,128], index: 4, kind: input, shape index: {}]
  %s5 = inlined_call_operand.hbm [shape: f32[128,128], index: 5, kind: input, shape index: {}]
  %s6 = inlined_call_operand.vmem [shape: f32[1,128], index: 6, kind: input, shape index: {}]
  %s7 = inlined_call_operand.hbm [shape: f32[48,128], index: 7, kind: output, shape index: {}]
  %s8 = sld [smem:[#allocation0]]
  $region77: #{tpu_custom_call.1} parent=0
    _
  %s10 = ssub.s32 1, %s8
  %s11 = scalar_select 0, %s10, %s8
  $region1: #{tpu_custom_call.1} parent=0
    #allocation2 [shape = 'u8[16384]{0}', space=vmem, size = 0x4000, scoped, tag = 'input window, operand 0']
    #allocation3 [shape = 's32[2]{0}', space=sflag, size = 0x8, scoped, tag = 'scoped memory for tpu_custom_call.1']
    #allocation4 [shape = 's32[2]{0}', space=sflag, size = 0x8, scoped, tag = 'scoped memory for tpu_custom_call.1']
    #allocation5 [shape = 'u8[65536]{0}', space=vmem, size = 0x10000, scoped, tag = 'input window, operand 1, single buffered']
    #allocation6 [shape = 's32[1]{0}', space=sflag, size = 0x4, scoped, tag = 'scoped memory for tpu_custom_call.1']
    #allocation7 [shape = 'u8[65536]{0}', space=vmem, size = 0x10000, scoped, tag = 'input window, operand 3, single buffered']
    #allocation8 [shape = 'u8[65536]{0}', space=vmem, size = 0x10000, scoped, tag = 'input window, operand 5, single buffered']
    #allocation9 [shape = 's32[1]{0}', space=sflag, size = 0x4, scoped, tag = 'scoped memory for tpu_custom_call.1']
    #allocation10 [shape = 'u8[16384]{0}', space=vmem, size = 0x4000, scoped, tag = 'output window, operand 0']
    %12 = vsyncpa [#allocation3], 0
    %s13 = scalar_lea.sflag [#allocation3], 1
    %14 = vsyncpa %s13, 0
    %15 = vsyncpa [#allocation6], 0
    %16 = vsyncpa [#allocation9], 0
    %17 = vsyncpa [#allocation4], 0
    %s18 = scalar_lea.sflag [#allocation4], 1
    %19 = vsyncpa %s18, 0
    loop: start=0, step=1, limit=5
    $region2: #{tpu_custom_call.1} parent=1 // loop_pre_header
      _
    $region3: #{tpu_custom_call.1} parent=1 // loop_header
      %s21 = sphi 0, %s25
      %p22 = scmp.ge.s32.totalorder %s21, 5
      %s31 = sphi 0, %s33
      %s34 = sphi 0, %s31
      %s35 = sphi 0, %s34
      %s51 = sphi 0, %s35
      %s55 = sphi 0, %s55
      %s57 = sphi 0, %s55
      %s58 = sphi 0, %s57
      %s72 = sphi 0, %s58
      %s76 = sphi 0, %s76
      %s78 = sphi 0, %s76
      %s79 = sphi 0, %s78
      %s93 = sphi 0, %s79
      %s97 = sphi 0, %s97
      %s99 = sphi 0, %s97
      %s100 = sphi 0, %s99
      %s114 = sphi 0, %s100
      %s118 = sphi 0, %s118
      %s120 = sphi 0, %s118
      %s121 = sphi 0, %s120
      %s135 = sphi 0, %s121
      %s139 = sphi 0, %s139
      %s141 = sphi 0, %s139
      %s142 = sphi 0, %s141
      %s156 = sphi 0, %s142
      %s160 = sphi 0, %s160
      %s162 = sphi 0, %s160
      %s163 = sphi 0, %s162
      %s177 = sphi 0, %s163
      %s183 = sphi 0, %s185
      %s186 = sphi 0, %s183
      %s187 = sphi 0, %s186
      %s203 = sphi 0, %s187
    $region4: #{tpu_custom_call.1} parent=1 // loop_header_branch
      %24 = sbr.rel (%p22) target = $region8
    $region5: #{tpu_custom_call.1} parent=1 // loop_body
      %s26 = ssub.s32 %s21, 1
      %s27 = ssub.s32 %s21, 2
      %s28 = sadd.s32 %s21, 1
      %s29 = ssub.s32 %s21, %s28
      %p30 = scmp.eq.s32.totalorder %s29, 0
      %s32 = sadd.s32 %s31, 1
      %s33 = scalar_select %p30, %s31, %s32
      %p36 = pneg %p30
      %p37 = scmp.eq.s32.totalorder %s21, 2
      %p38 = por %p36, %p37
      %p39 = scmp.ne.s32.totalorder %s31, %s34
      %p40 = scmp.eq.s32.totalorder %s21, 0
      %p41 = por %p39, %p40
      %p42 = scmp.ne.s32.totalorder %s31, %s34
      %p43 = scmp.eq.s32.totalorder %s26, 2
      %p44 = por %p42, %p43
      %p45 = scmp.ne.s32.totalorder %s34, %s35
      %p46 = scmp.eq.s32.totalorder %s26, 0
      %p47 = por %p45, %p46
      %p48 = scmp.ne.s32.totalorder %s34, %s35
      %p49 = scmp.eq.s32.totalorder %s27, 2
      %p50 = por %p48, %p49
      %p52 = scmp.ne.s32.totalorder %s35, %s51
      %p53 = scmp.eq.s32.totalorder %s27, 0
      %p54 = por %p52, %p53
      %s56 = sadd.s32 %s55, 1
      %p59 = scmp.eq.s32.totalorder %s21, 2
      %p60 = scmp.ne.s32.totalorder %s55, %s57
      %p61 = scmp.eq.s32.totalorder %s21, 0
      %p62 = por %p60, %p61
      %p63 = scmp.ne.s32.totalorder %s55, %s57
      %p64 = scmp.eq.s32.totalorder %s26, 2
      %p65 = por %p63, %p64
      %p66 = scmp.ne.s32.totalorder %s57, %s58
      %p67 = scmp.eq.s32.totalorder %s26, 0
      %p68 = por %p66, %p67
      %p69 = scmp.ne.s32.totalorder %s57, %s58
      %p70 = scmp.eq.s32.totalorder %s27, 2
      %p71 = por %p69, %p70
      %p73 = scmp.ne.s32.totalorder %s58, %s72
      %p74 = scmp.eq.s32.totalorder %s27, 0
      %p75 = por %p73, %p74
      %s77 = sadd.s32 %s76, 1
      %p80 = scmp.eq.s32.totalorder %s21, 2
      %p81 = scmp.ne.s32.totalorder %s76, %s78
      %p82 = scmp.eq.s32.totalorder %s21, 0
      %p83 = por %p81, %p82
      %p84 = scmp.ne.s32.totalorder %s76, %s78
      %p85 = scmp.eq.s32.totalorder %s26, 2
      %p86 = por %p84, %p85
      %p87 = scmp.ne.s32.totalorder %s78, %s79
      %p88 = scmp.eq.s32.totalorder %s26, 0
      %p89 = por %p87, %p88
      %p90 = scmp.ne.s32.totalorder %s78, %s79
      %p91 = scmp.eq.s32.totalorder %s27, 2
      %p92 = por %p90, %p91
      %p94 = scmp.ne.s32.totalorder %s79, %s93
      %p95 = scmp.eq.s32.totalorder %s27, 0
      %p96 = por %p94, %p95
      %s98 = sadd.s32 %s97, 1
      %p101 = scmp.eq.s32.totalorder %s21, 2
      %p102 = scmp.ne.s32.totalorder %s97, %s99
      %p103 = scmp.eq.s32.totalorder %s21, 0
      %p104 = por %p102, %p103
      %p105 = scmp.ne.s32.totalorder %s97, %s99
      %p106 = scmp.eq.s32.totalorder %s26, 2
      %p107 = por %p105, %p106
      %p108 = scmp.ne.s32.totalorder %s99, %s100
      %p109 = scmp.eq.s32.totalorder %s26, 0
      %p110 = por %p108, %p109
      %p111 = scmp.ne.s32.totalorder %s99, %s100
      %p112 = scmp.eq.s32.totalorder %s27, 2
      %p113 = por %p111, %p112
      %p115 = scmp.ne.s32.totalorder %s100, %s114
      %p116 = scmp.eq.s32.totalorder %s27, 0
      %p117 = por %p115, %p116
      %s119 = sadd.s32 %s118, 1
      %p122 = scmp.eq.s32.totalorder %s21, 2
      %p123 = scmp.ne.s32.totalorder %s118, %s120
      %p124 = scmp.eq.s32.totalorder %s21, 0
      %p125 = por %p123, %p124
      %p126 = scmp.ne.s32.totalorder %s118, %s120
      %p127 = scmp.eq.s32.totalorder %s26, 2
      %p128 = por %p126, %p127
      %p129 = scmp.ne.s32.totalorder %s120, %s121
      %p130 = scmp.eq.s32.totalorder %s26, 0
      %p131 = por %p129, %p130
      %p132 = scmp.ne.s32.totalorder %s120, %s121
      %p133 = scmp.eq.s32.totalorder %s27, 2
      %p134 = por %p132, %p133
      %p136 = scmp.ne.s32.totalorder %s121, %s135
      %p137 = scmp.eq.s32.totalorder %s27, 0
      %p138 = por %p136, %p137
      %s140 = sadd.s32 %s139, 1
      %p143 = scmp.eq.s32.totalorder %s21, 2
      %p144 = scmp.ne.s32.totalorder %s139, %s141
      %p145 = scmp.eq.s32.totalorder %s21, 0
      %p146 = por %p144, %p145
      %p147 = scmp.ne.s32.totalorder %s139, %s141
      %p148 = scmp.eq.s32.totalorder %s26, 2
      %p149 = por %p147, %p148
      %p150 = scmp.ne.s32.totalorder %s141, %s142
      %p151 = scmp.eq.s32.totalorder %s26, 0
      %p152 = por %p150, %p151
      %p153 = scmp.ne.s32.totalorder %s141, %s142
      %p154 = scmp.eq.s32.totalorder %s27, 2
      %p155 = por %p153, %p154
      %p157 = scmp.ne.s32.totalorder %s142, %s156
      %p158 = scmp.eq.s32.totalorder %s27, 0
      %p159 = por %p157, %p158
      %s161 = sadd.s32 %s160, 1
      %p164 = scmp.eq.s32.totalorder %s21, 2
      %p165 = scmp.ne.s32.totalorder %s160, %s162
      %p166 = scmp.eq.s32.totalorder %s21, 0
      %p167 = por %p165, %p166
      %p168 = scmp.ne.s32.totalorder %s160, %s162
      %p169 = scmp.eq.s32.totalorder %s26, 2
      %p170 = por %p168, %p169
      %p171 = scmp.ne.s32.totalorder %s162, %s163
      %p172 = scmp.eq.s32.totalorder %s26, 0
      %p173 = por %p171, %p172
      %p174 = scmp.ne.s32.totalorder %s162, %s163
      %p175 = scmp.eq.s32.totalorder %s27, 2
      %p176 = por %p174, %p175
      %p178 = scmp.ne.s32.totalorder %s163, %s177
      %p179 = scmp.eq.s32.totalorder %s27, 0
      %p180 = por %p178, %p179
      %s181 = ssub.s32 %s21, %s28
      %p182 = scmp.eq.s32.totalorder %s181, 0
      %s184 = sadd.s32 %s183, 1
      %s185 = scalar_select %p182, %s183, %s184
      %p188 = pneg %p182
      %p189 = scmp.eq.s32.totalorder %s21, 2
      %p190 = por %p188, %p189
      %p191 = scmp.ne.s32.totalorder %s183, %s186
      %p192 = scmp.eq.s32.totalorder %s21, 0
      %p193 = por %p191, %p192
      %p194 = scmp.ne.s32.totalorder %s183, %s186
      %p195 = scmp.eq.s32.totalorder %s26, 2
      %p196 = por %p194, %p195
      %p197 = scmp.ne.s32.totalorder %s186, %s187
      %p198 = scmp.eq.s32.totalorder %s26, 0
      %p199 = por %p197, %p198
      %p200 = scmp.ne.s32.totalorder %s186, %s187
      %p201 = scmp.eq.s32.totalorder %s27, 2
      %p202 = por %p200, %p201
      %p204 = scmp.ne.s32.totalorder %s187, %s203
      %p205 = scmp.eq.s32.totalorder %s27, 0
      %p206 = por %p204, %p205
      %p207 = scmp.le.s32.totalorder 1, %s21
      %p208 = scmp.lt.s32.totalorder %s21, 4
      %p209 = pnand %p207, %p208
      %p210 = pneg %p209
      // Predicated region
      $region9: #{tpu_custom_call.1} parent=5 // pred_check
        _
      $region10: #{tpu_custom_call.1} parent=5 // pred_check_branch
        %212 = sbr.rel (%p209) target = $region12
      $region11: #{tpu_custom_call.1} parent=5 // pred_region
        %s213 = ssub.s32 %s21, 1
        // Predicated region
        $region13: #{tpu_custom_call.1} parent=11 // pred_check
          %p214 = pneg %p68
        $region14: #{tpu_custom_call.1} parent=11 // pred_check_branch
          %216 = sbr.rel (%p214) target = $region16
        $region15: #{tpu_custom_call.1} parent=11 // pred_region
          %s218 = ssub.s32 2048, 2048
          %219 = vsyncadd [#allocation6], %s218
          %s220 = sshll.u32 [#allocation5], 4
          %s221 = int_to_ptr.vmem [resolvable:$true] %s220
          %226 = dma.hbm_to_vmem [thread:$0]  %s1, 2048, %s221, [#allocation6], 128, 128, 8
        $region16: #{tpu_custom_call.1} parent=11 // pred_fallthru
          _
        // Predicated region
        $region17: #{tpu_custom_call.1} parent=11 // pred_check
          %p227 = pneg %p89
        $region18: #{tpu_custom_call.1} parent=11 // pred_check_branch
          %229 = sbr.rel (%p227) target = $region20
        $region19: #{tpu_custom_call.1} parent=11 // pred_region
          _
        $region20: #{tpu_custom_call.1} parent=11 // pred_fallthru
          _
        // Predicated region
        $region21: #{tpu_custom_call.1} parent=11 // pred_check
          %p230 = pneg %p110
        $region22: #{tpu_custom_call.1} parent=11 // pred_check_branch
          %232 = sbr.rel (%p230) target = $region24
        $region23: #{tpu_custom_call.1} parent=11 // pred_region
          %s234 = ssub.s32 2048, 2048
          %235 = vsyncadd [#allocation6], %s234
          %s236 = sshll.u32 [#allocation7], 4
          %s237 = int_to_ptr.vmem [resolvable:$true] %s236
          %242 = dma.hbm_to_vmem [thread:$0]  %s3, 2048, %s237, [#allocation6], 128, 128, 8
        $region24: #{tpu_custom_call.1} parent=11 // pred_fallthru
          _
        // Predicated region
        $region25: #{tpu_custom_call.1} parent=11 // pred_check
          %p243 = pneg %p131
        $region26: #{tpu_custom_call.1} parent=11 // pred_check_branch
          %245 = sbr.rel (%p243) target = $region28
        $region27: #{tpu_custom_call.1} parent=11 // pred_region
          _
        $region28: #{tpu_custom_call.1} parent=11 // pred_fallthru
          _
        // Predicated region
        $region29: #{tpu_custom_call.1} parent=11 // pred_check
          %p246 = pneg %p152
        $region30: #{tpu_custom_call.1} parent=11 // pred_check_branch
          %248 = sbr.rel (%p246) target = $region32
        $region31: #{tpu_custom_call.1} parent=11 // pred_region
          %s250 = ssub.s32 2048, 2048
          %251 = vsyncadd [#allocation9], %s250
          %s252 = sshll.u32 [#allocation8], 4
          %s253 = int_to_ptr.vmem [resolvable:$true] %s252
          %258 = dma.hbm_to_vmem [thread:$0]  %s5, 2048, %s253, [#allocation9], 128, 128, 8
        $region32: #{tpu_custom_call.1} parent=11 // pred_fallthru
          _
        // Predicated region
        $region33: #{tpu_custom_call.1} parent=11 // pred_check
          %p259 = pneg %p173
        $region34: #{tpu_custom_call.1} parent=11 // pred_check_branch
          %261 = sbr.rel (%p259) target = $region36
        $region35: #{tpu_custom_call.1} parent=11 // pred_region
          _
        $region36: #{tpu_custom_call.1} parent=11 // pred_fallthru
          _
      $region12: #{tpu_custom_call.1} parent=5 // pred_fallthru
        _
      %p262 = scmp.lt.s32.totalorder %s21, 3
      // Predicated region
      $region37: #{tpu_custom_call.1} parent=5 // pred_check
        %p263 = pneg %p262
      $region38: #{tpu_custom_call.1} parent=5 // pred_check_branch
        %265 = sbr.rel (%p263) target = $region40
      $region39: #{tpu_custom_call.1} parent=5 // pred_region
        // Predicated region
        $region41: #{tpu_custom_call.1} parent=39 // pred_check
          %p266 = pneg %p41
        $region42: #{tpu_custom_call.1} parent=39 // pred_check_branch
          %268 = sbr.rel (%p266) target = $region44
        $region43: #{tpu_custom_call.1} parent=39 // pred_region
          %s269 = sand.u32 %s31, 1
          %s270 = scalar_lea.sflag [#allocation3], %s269
          %s271 = sand.u32 %s31, 1
          %s272 = smul.addr %s271, 16
          %s273 = scalar_lea.vmem [#allocation2], %s272
          %s274 = smul.u32 2, %s21
          %s276 = ssub.s32 256, 256
          %277 = vsyncadd %s270, %s276
          %s278 = smul.addr %s274, 128
          %s279 = scalar_lea.hbm %s0, %s278
          %s280 = sshll.u32 %s273, 4
          %s281 = int_to_ptr.vmem [resolvable:$true] %s280
          %286 = dma.hbm_to_vmem [thread:$0]  %s279, 256, %s281, %s270, 128, 128, 8
        $region44: #{tpu_custom_call.1} parent=39 // pred_fallthru
          _
      $region40: #{tpu_custom_call.1} parent=5 // pred_fallthru
        _
      %p287 = scmp.le.s32.totalorder 1, %s21
      %p288 = scmp.lt.s32.totalorder %s21, 4
      %p289 = pnand %p287, %p288
      %p290 = pneg %p289
      // Predicated region
      $region45: #{tpu_custom_call.1} parent=5 // pred_check
        _
      $region46: #{tpu_custom_call.1} parent=5 // pred_check_branch
        %292 = sbr.rel (%p289) target = $region48
      $region47: #{tpu_custom_call.1} parent=5 // pred_region
        %s293 = ssub.s32 %s21, 1
        %s294 = sand.u32 %s34, 1
        %s295 = scalar_lea.sflag [#allocation3], %s294
        %s296 = sand.u32 %s34, 1
        %s297 = smul.addr %s296, 16
        %s298 = scalar_lea.vmem [#allocation2], %s297
        // Predicated region
        $region49: #{tpu_custom_call.1} parent=47 // pred_check
          %p299 = pneg %p47
        $region50: #{tpu_custom_call.1} parent=47 // pred_check_branch
          %301 = sbr.rel (%p299) target = $region52
        $region51: #{tpu_custom_call.1} parent=47 // pred_region
          %302 = dma.done %s295, 256
        $region52: #{tpu_custom_call.1} parent=47 // pred_fallthru
          _
        // Predicated region
        $region53: #{tpu_custom_call.1} parent=47 // pred_check
          %p303 = pneg %p68
        $region54: #{tpu_custom_call.1} parent=47 // pred_check_branch
          %305 = sbr.rel (%p303) target = $region56
        $region55: #{tpu_custom_call.1} parent=47 // pred_region
          %306 = dma.done [#allocation6], 2048
        $region56: #{tpu_custom_call.1} parent=47 // pred_fallthru
          _
        // Predicated region
        $region57: #{tpu_custom_call.1} parent=47 // pred_check
          %p307 = pneg %p110
        $region58: #{tpu_custom_call.1} parent=47 // pred_check_branch
          %309 = sbr.rel (%p307) target = $region60
        $region59: #{tpu_custom_call.1} parent=47 // pred_region
          %310 = dma.done [#allocation6], 2048
        $region60: #{tpu_custom_call.1} parent=47 // pred_fallthru
          _
        // Predicated region
        $region61: #{tpu_custom_call.1} parent=47 // pred_check
          %p311 = pneg %p152
        $region62: #{tpu_custom_call.1} parent=47 // pred_check_branch
          %313 = sbr.rel (%p311) target = $region64
        $region63: #{tpu_custom_call.1} parent=47 // pred_region
          %314 = dma.done [#allocation9], 2048
        $region64: #{tpu_custom_call.1} parent=47 // pred_fallthru
          _
        %s315 = sand.u32 %s34, 1
        %s316 = scalar_lea.sflag [#allocation3], %s315
        %s317 = sand.u32 %s34, 1
        %s318 = smul.addr %s317, 16
        %s319 = scalar_lea.vmem [#allocation2], %s318
        %p320 = pneg %p47
        %p321 = pneg %p44
        %p322 = pneg %p68
        %p323 = pneg %p65
        %p324 = pneg %p89
        %p325 = pneg %p86
        %p326 = pneg %p110
        %p327 = pneg %p107
        %p328 = pneg %p131
        %p329 = pneg %p128
        %p330 = pneg %p152
        %p331 = pneg %p149
        %p332 = pneg %p173
        %p333 = pneg %p170
        %p334 = pneg %p199
        %p335 = pneg %p196
        %s336 = sand.u32 %s186, 1
        %s337 = scalar_lea.sflag [#allocation4], %s336
        %s338 = sand.u32 %s186, 1
        %s339 = smul.addr %s338, 16
        %s340 = scalar_lea.vmem [#allocation10], %s339
        %s341 = smul.u32 2, %s26
        %s342 = smul.u32 2, %s26
        %v343 = vld [vmem:[%s298] sm:$0xff]
        %v344 = vld [vmem:[%s298 + $0x8] sm:$0xff]
        %v345 = vld [vmem:[#allocation5] sm:$0xff]
        %v346 = vld [vmem:[#allocation5 + $0x8] sm:$0xff]
        %v347 = vld [vmem:[#allocation5 + $0x10] sm:$0xff]
        %v348 = vld [vmem:[#allocation5 + $0x18] sm:$0xff]
        %v349 = vld [vmem:[#allocation5 + $0x20] sm:$0xff]
        %v350 = vld [vmem:[#allocation5 + $0x28] sm:$0xff]
        %v351 = vld [vmem:[#allocation5 + $0x30] sm:$0xff]
        %v352 = vld [vmem:[#allocation5 + $0x38] sm:$0xff]
        %v353 = vld [vmem:[#allocation5 + $0x40] sm:$0xff]
        %v354 = vld [vmem:[#allocation5 + $0x48] sm:$0xff]
        %v355 = vld [vmem:[#allocation5 + $0x50] sm:$0xff]
        %v356 = vld [vmem:[#allocation5 + $0x58] sm:$0xff]
        %v357 = vld [vmem:[#allocation5 + $0x60] sm:$0xff]
        %v358 = vld [vmem:[#allocation5 + $0x68] sm:$0xff]
        %v359 = vld [vmem:[#allocation5 + $0x70] sm:$0xff]
        %v360 = vld [vmem:[#allocation5 + $0x78] sm:$0xff]
        %v361 = vld [vmem:[%s2] sm:$0x1]
        %v363 = vlaneseq
        %v364 = vshrl.u32 %v363, 7
        %v365 = vsub.s32 0, %v364
        %v366 = vrot.slane %v361, %v365
        %368 = vmatprep.subr.mxu0 0.0
        %369 = vmatpush1.msra.mxu0 %v360
        %370 = vmatprep.subr.mxu0 0.0
        %371 = vmatpush1.msra.mxu0 %v359
        %372 = vmatprep.subr.mxu0 0.0
        %373 = vmatpush1.msra.mxu0 %v358
        %374 = vmatprep.subr.mxu0 0.0
        %375 = vmatpush1.msra.mxu0 %v357
        %376 = vmatprep.subr.mxu0 0.0
        %377 = vmatpush1.msra.mxu0 %v356
        %378 = vmatprep.subr.mxu0 0.0
        %379 = vmatpush1.msra.mxu0 %v355
        %380 = vmatprep.subr.mxu0 0.0
        %381 = vmatpush1.msra.mxu0 %v354
        %382 = vmatprep.subr.mxu0 0.0
        %383 = vmatpush1.msra.mxu0 %v353
        %384 = vmatprep.subr.mxu0 0.0
        %385 = vmatpush1.msra.mxu0 %v352
        %386 = vmatprep.subr.mxu0 0.0
        %387 = vmatpush1.msra.mxu0 %v351
        %388 = vmatprep.subr.mxu0 0.0
        %389 = vmatpush1.msra.mxu0 %v350
        %390 = vmatprep.subr.mxu0 0.0
        %391 = vmatpush1.msra.mxu0 %v349
        %392 = vmatprep.subr.mxu0 0.0
        %393 = vmatpush1.msra.mxu0 %v348
        %394 = vmatprep.subr.mxu0 0.0
        %395 = vmatpush1.msra.mxu0 %v347
        %396 = vmatprep.subr.mxu0 0.0
        %397 = vmatpush1.msra.mxu0 %v346
        %398 = vmatprep.subr.mxu0 0.0
        %399 = vmatpush1.msra.mxu0 %v345
        %400 = vmatprep.subr.mxu0 0.0
        %401 = vmatpush2.msra.mxu0 0.0
        %402 = vmatprep.subr.mxu0 0.0
        %403 = vmatpush2.msra.mxu0 0.0
        %404 = vmatprep.subr.mxu0 0.0
        %405 = vmatpush2.msra.mxu0 0.0
        %406 = vmatprep.subr.mxu0 0.0
        %407 = vmatpush2.msra.mxu0 0.0
        %408 = vmatprep.subr.mxu0 0.0
        %409 = vmatpush2.msra.mxu0 0.0
        %410 = vmatprep.subr.mxu0 0.0
        %411 = vmatpush2.msra.mxu0 0.0
        %412 = vmatprep.subr.mxu0 0.0
        %413 = vmatpush2.msra.mxu0 0.0
        %414 = vmatprep.subr.mxu0 0.0
        %415 = vmatpush2.msra.mxu0 0.0
        %416 = vmatprep.subr.mxu0 0.0
        %417 = vmatpush2.msra.mxu0 0.0
        %418 = vmatprep.subr.mxu0 0.0
        %419 = vmatpush2.msra.mxu0 0.0
        %420 = vmatprep.subr.mxu0 0.0
        %421 = vmatpush2.msra.mxu0 0.0
        %422 = vmatprep.subr.mxu0 0.0
        %423 = vmatpush2.msra.mxu0 0.0
        %424 = vmatprep.subr.mxu0 0.0
        %425 = vmatpush2.msra.mxu0 0.0
        %426 = vmatprep.subr.mxu0 0.0
        %427 = vmatpush2.msra.mxu0 0.0
        %428 = vmatprep.subr.mxu0 0.0
        %429 = vmatpush2.msra.mxu0 0.0
        %430 = vmatprep.subr.mxu0 0.0
        %431 = vmatpush2.msra.mxu0 0.0
        %432 = vmatprep.mubr.f32.mxu0 0.0
        %433 = vmatmul.mubr.f32.gmra.mxu0 %v343
        %v434 = vpop.f32.mrf.mxu0
        %v435 = vadd.f32 %v366, %v434
        %v436 = vpop.f32.mrf.mxu0
        %437 = vmatprep.mubr.f32.mxu0 0.0
        %438 = vmatmul.mubr.f32.gmra.mxu0 %v344
        %v439 = vpop.f32.mrf.mxu0
        %v440 = vadd.f32 %v366, %v439
        %v441 = vpop.f32.mrf.mxu0
        %442 = vdwg.mxu0
        %v443 = vmax.f32 %v435, 0.0
        %v444 = vmax.f32 %v440, 0.0
        %v445 = vld [vmem:[#allocation7] sm:$0xff]
        %v446 = vld [vmem:[#allocation7 + $0x8] sm:$0xff]
        %v447 = vld [vmem:[#allocation7 + $0x10] sm:$0xff]
        %v448 = vld [vmem:[#allocation7 + $0x18] sm:$0xff]
        %v449 = vld [vmem:[#allocation7 + $0x20] sm:$0xff]
        %v450 = vld [vmem:[#allocation7 + $0x28] sm:$0xff]
        %v451 = vld [vmem:[#allocation7 + $0x30] sm:$0xff]
        %v452 = vld [vmem:[#allocation7 + $0x38] sm:$0xff]
        %v453 = vld [vmem:[#allocation7 + $0x40] sm:$0xff]
        %v454 = vld [vmem:[#allocation7 + $0x48] sm:$0xff]
        %v455 = vld [vmem:[#allocation7 + $0x50] sm:$0xff]
        %v456 = vld [vmem:[#allocation7 + $0x58] sm:$0xff]
        %v457 = vld [vmem:[#allocation7 + $0x60] sm:$0xff]
        %v458 = vld [vmem:[#allocation7 + $0x68] sm:$0xff]
        %v459 = vld [vmem:[#allocation7 + $0x70] sm:$0xff]
        %v460 = vld [vmem:[#allocation7 + $0x78] sm:$0xff]
        %v461 = vld [vmem:[%s4] sm:$0x1]
        %v463 = vlaneseq
        %v464 = vshrl.u32 %v463, 7
        %v465 = vsub.s32 0, %v464
        %v466 = vrot.slane %v461, %v465
        %468 = vmatprep.subr.mxu0 0.0
        %469 = vmatpush1.msra.mxu0 %v460
        %470 = vmatprep.subr.mxu0 0.0
        %471 = vmatpush1.msra.mxu0 %v459
        %472 = vmatprep.subr.mxu0 0.0
        %473 = vmatpush1.msra.mxu0 %v458
        %474 = vmatprep.subr.mxu0 0.0
        %475 = vmatpush1.msra.mxu0 %v457
        %476 = vmatprep.subr.mxu0 0.0
        %477 = vmatpush1.msra.mxu0 %v456
        %478 = vmatprep.subr.mxu0 0.0
        %479 = vmatpush1.msra.mxu0 %v455
        %480 = vmatprep.subr.mxu0 0.0
        %481 = vmatpush1.msra.mxu0 %v454
        %482 = vmatprep.subr.mxu0 0.0
        %483 = vmatpush1.msra.mxu0 %v453
        %484 = vmatprep.subr.mxu0 0.0
        %485 = vmatpush1.msra.mxu0 %v452
        %486 = vmatprep.subr.mxu0 0.0
        %487 = vmatpush1.msra.mxu0 %v451
        %488 = vmatprep.subr.mxu0 0.0
        %489 = vmatpush1.msra.mxu0 %v450
        %490 = vmatprep.subr.mxu0 0.0
        %491 = vmatpush1.msra.mxu0 %v449
        %492 = vmatprep.subr.mxu0 0.0
        %493 = vmatpush1.msra.mxu0 %v448
        %494 = vmatprep.subr.mxu0 0.0
        %495 = vmatpush1.msra.mxu0 %v447
        %496 = vmatprep.subr.mxu0 0.0
        %497 = vmatpush1.msra.mxu0 %v446
        %498 = vmatprep.subr.mxu0 0.0
        %499 = vmatpush1.msra.mxu0 %v445
        %500 = vmatprep.subr.mxu0 0.0
        %501 = vmatpush2.msra.mxu0 0.0
        %502 = vmatprep.subr.mxu0 0.0
        %503 = vmatpush2.msra.mxu0 0.0
        %504 = vmatprep.subr.mxu0 0.0
        %505 = vmatpush2.msra.mxu0 0.0
        %506 = vmatprep.subr.mxu0 0.0
        %507 = vmatpush2.msra.mxu0 0.0
        %508 = vmatprep.subr.mxu0 0.0
        %509 = vmatpush2.msra.mxu0 0.0
        %510 = vmatprep.subr.mxu0 0.0
        %511 = vmatpush2.msra.mxu0 0.0
        %512 = vmatprep.subr.mxu0 0.0
        %513 = vmatpush2.msra.mxu0 0.0
        %514 = vmatprep.subr.mxu0 0.0
        %515 = vmatpush2.msra.mxu0 0.0
        %516 = vmatprep.subr.mxu0 0.0
        %517 = vmatpush2.msra.mxu0 0.0
        %518 = vmatprep.subr.mxu0 0.0
        %519 = vmatpush2.msra.mxu0 0.0
        %520 = vmatprep.subr.mxu0 0.0
        %521 = vmatpush2.msra.mxu0 0.0
        %522 = vmatprep.subr.mxu0 0.0
        %523 = vmatpush2.msra.mxu0 0.0
        %524 = vmatprep.subr.mxu0 0.0
        %525 = vmatpush2.msra.mxu0 0.0
        %526 = vmatprep.subr.mxu0 0.0
        %527 = vmatpush2.msra.mxu0 0.0
        %528 = vmatprep.subr.mxu0 0.0
        %529 = vmatpush2.msra.mxu0 0.0
        %530 = vmatprep.subr.mxu0 0.0
        %531 = vmatpush2.msra.mxu0 0.0
        %532 = vmatprep.mubr.f32.mxu0 0.0
        %533 = vmatmul.mubr.f32.gmra.mxu0 %v443
        %v534 = vpop.f32.mrf.mxu0
        %v535 = vadd.f32 %v466, %v534
        %v536 = vpop.f32.mrf.mxu0
        %537 = vmatprep.mubr.f32.mxu0 0.0
        %538 = vmatmul.mubr.f32.gmra.mxu0 %v444
        %v539 = vpop.f32.mrf.mxu0
        %v540 = vadd.f32 %v466, %v539
        %v541 = vpop.f32.mrf.mxu0
        %542 = vdwg.mxu0
        %v543 = vmax.f32 %v535, 0.0
        %v544 = vmax.f32 %v540, 0.0
        %v545 = vld [vmem:[#allocation8] sm:$0xff]
        %v546 = vld [vmem:[#allocation8 + $0x8] sm:$0xff]
        %v547 = vld [vmem:[#allocation8 + $0x10] sm:$0xff]
        %v548 = vld [vmem:[#allocation8 + $0x18] sm:$0xff]
        %v549 = vld [vmem:[#allocation8 + $0x20] sm:$0xff]
        %v550 = vld [vmem:[#allocation8 + $0x28] sm:$0xff]
        %v551 = vld [vmem:[#allocation8 + $0x30] sm:$0xff]
        %v552 = vld [vmem:[#allocation8 + $0x38] sm:$0xff]
        %v553 = vld [vmem:[#allocation8 + $0x40] sm:$0xff]
        %v554 = vld [vmem:[#allocation8 + $0x48] sm:$0xff]
        %v555 = vld [vmem:[#allocation8 + $0x50] sm:$0xff]
        %v556 = vld [vmem:[#allocation8 + $0x58] sm:$0xff]
        %v557 = vld [vmem:[#allocation8 + $0x60] sm:$0xff]
        %v558 = vld [vmem:[#allocation8 + $0x68] sm:$0xff]
        %v559 = vld [vmem:[#allocation8 + $0x70] sm:$0xff]
        %v560 = vld [vmem:[#allocation8 + $0x78] sm:$0xff]
        %v561 = vld [vmem:[%s6] sm:$0x1]
        %v563 = vlaneseq
        %v564 = vshrl.u32 %v563, 7
        %v565 = vsub.s32 0, %v564
        %v566 = vrot.slane %v561, %v565
        %568 = vmatprep.subr.mxu0 0.0
        %569 = vmatpush1.msra.mxu0 %v560
        %570 = vmatprep.subr.mxu0 0.0
        %571 = vmatpush1.msra.mxu0 %v559
        %572 = vmatprep.subr.mxu0 0.0
        %573 = vmatpush1.msra.mxu0 %v558
        %574 = vmatprep.subr.mxu0 0.0
        %575 = vmatpush1.msra.mxu0 %v557
        %576 = vmatprep.subr.mxu0 0.0
        %577 = vmatpush1.msra.mxu0 %v556
        %578 = vmatprep.subr.mxu0 0.0
        %579 = vmatpush1.msra.mxu0 %v555
        %580 = vmatprep.subr.mxu0 0.0
        %581 = vmatpush1.msra.mxu0 %v554
        %582 = vmatprep.subr.mxu0 0.0
        %583 = vmatpush1.msra.mxu0 %v553
        %584 = vmatprep.subr.mxu0 0.0
        %585 = vmatpush1.msra.mxu0 %v552
        %586 = vmatprep.subr.mxu0 0.0
        %587 = vmatpush1.msra.mxu0 %v551
        %588 = vmatprep.subr.mxu0 0.0
        %589 = vmatpush1.msra.mxu0 %v550
        %590 = vmatprep.subr.mxu0 0.0
        %591 = vmatpush1.msra.mxu0 %v549
        %592 = vmatprep.subr.mxu0 0.0
        %593 = vmatpush1.msra.mxu0 %v548
        %594 = vmatprep.subr.mxu0 0.0
        %595 = vmatpush1.msra.mxu0 %v547
        %596 = vmatprep.subr.mxu0 0.0
        %597 = vmatpush1.msra.mxu0 %v546
        %598 = vmatprep.subr.mxu0 0.0
        %599 = vmatpush1.msra.mxu0 %v545
        %600 = vmatprep.subr.mxu0 0.0
        %601 = vmatpush2.msra.mxu0 0.0
        %602 = vmatprep.subr.mxu0 0.0
        %603 = vmatpush2.msra.mxu0 0.0
        %604 = vmatprep.subr.mxu0 0.0
        %605 = vmatpush2.msra.mxu0 0.0
        %606 = vmatprep.subr.mxu0 0.0
        %607 = vmatpush2.msra.mxu0 0.0
        %608 = vmatprep.subr.mxu0 0.0
        %609 = vmatpush2.msra.mxu0 0.0
        %610 = vmatprep.subr.mxu0 0.0
        %611 = vmatpush2.msra.mxu0 0.0
        %612 = vmatprep.subr.mxu0 0.0
        %613 = vmatpush2.msra.mxu0 0.0
        %614 = vmatprep.subr.mxu0 0.0
        %615 = vmatpush2.msra.mxu0 0.0
        %616 = vmatprep.subr.mxu0 0.0
        %617 = vmatpush2.msra.mxu0 0.0
        %618 = vmatprep.subr.mxu0 0.0
        %619 = vmatpush2.msra.mxu0 0.0
        %620 = vmatprep.subr.mxu0 0.0
        %621 = vmatpush2.msra.mxu0 0.0
        %622 = vmatprep.subr.mxu0 0.0
        %623 = vmatpush2.msra.mxu0 0.0
        %624 = vmatprep.subr.mxu0 0.0
        %625 = vmatpush2.msra.mxu0 0.0
        %626 = vmatprep.subr.mxu0 0.0
        %627 = vmatpush2.msra.mxu0 0.0
        %628 = vmatprep.subr.mxu0 0.0
        %629 = vmatpush2.msra.mxu0 0.0
        %630 = vmatprep.subr.mxu0 0.0
        %631 = vmatpush2.msra.mxu0 0.0
        %632 = vmatprep.mubr.f32.mxu0 0.0
        %633 = vmatmul.mubr.f32.gmra.mxu0 %v543
        %v634 = vpop.f32.mrf.mxu0
        %v635 = vadd.f32 %v566, %v634
        %v636 = vpop.f32.mrf.mxu0
        %637 = vmatprep.mubr.f32.mxu0 0.0
        %638 = vmatmul.mubr.f32.gmra.mxu0 %v544
        %v639 = vpop.f32.mrf.mxu0
        %v640 = vadd.f32 %v566, %v639
        %v641 = vpop.f32.mrf.mxu0
        %642 = vdwg.mxu0
        %v643 = vsub.f32 0.0, %v635
        %v644 = vsub.f32 0.0, %v640
        %v645 = vmul.f32 %v643, 1.442695
        %v646 = vpow.pop %v645
        %v647 = vmul.f32 %v644, 1.442695
        %v648 = vpow.pop %v647
        %v649 = vadd.f32 %v646, 1.0
        %v650 = vadd.f32 %v648, 1.0
        %v651 = vrcp.pop %v649
        %v652 = vmul.f32 1.0, %v651
        %v653 = vrcp.pop %v650
        %v654 = vmul.f32 1.0, %v653
        %655 = vst [vmem:[%s340] sm:$0xff] %v652
        %656 = vst [vmem:[%s340 + $0x8] sm:$0xff] %v654
        %s657 = sand.u32 %s186, 1
        %s658 = scalar_lea.sflag [#allocation4], %s657
        %s659 = sand.u32 %s186, 1
        %s660 = smul.addr %s659, 16
        %s661 = scalar_lea.vmem [#allocation10], %s660
        // Predicated region
        $region65: #{tpu_custom_call.1} parent=47 // pred_check
          %p662 = pneg %p196
        $region66: #{tpu_custom_call.1} parent=47 // pred_check_branch
          %664 = sbr.rel (%p662) target = $region68
        $region67: #{tpu_custom_call.1} parent=47 // pred_region
          %s665 = smul.u32 2, %s26
          %s667 = ssub.s32 256, 256
          %668 = vsyncadd %s658, %s667
          %s669 = smul.addr %s665, 128
          %s670 = scalar_lea.hbm %s7, %s669
          %s671 = sshll.u32 %s661, 4
          %s672 = int_to_ptr.vmem [resolvable:$true] %s671
          %677 = dma.vmem_to_hbm [thread:$0]  %s672, 256, %s670, %s658, 128, 128, 8
        $region68: #{tpu_custom_call.1} parent=47 // pred_fallthru
          _
      $region48: #{tpu_custom_call.1} parent=5 // pred_fallthru
        _
      %p678 = scmp.le.s32.totalorder 2, %s21
      // Predicated region
      $region69: #{tpu_custom_call.1} parent=5 // pred_check
        %p679 = pneg %p678
      $region70: #{tpu_custom_call.1} parent=5 // pred_check_branch
        %681 = sbr.rel (%p679) target = $region72
      $region71: #{tpu_custom_call.1} parent=5 // pred_region
        %s682 = ssub.s32 %s21, 2
        // Predicated region
        $region73: #{tpu_custom_call.1} parent=71 // pred_check
          %p683 = pneg %p202
        $region74: #{tpu_custom_call.1} parent=71 // pred_check_branch
          %685 = sbr.rel (%p683) target = $region76
        $region75: #{tpu_custom_call.1} parent=71 // pred_region
          %s686 = sand.u32 %s187, 1
          %s687 = scalar_lea.sflag [#allocation4], %s686
          %s688 = sand.u32 %s187, 1
          %s689 = smul.addr %s688, 16
          %s690 = scalar_lea.vmem [#allocation10], %s689
          %691 = dma.done %s687, 256
        $region76: #{tpu_custom_call.1} parent=71 // pred_fallthru
          _
      $region72: #{tpu_custom_call.1} parent=5 // pred_fallthru
        _
    $region6: #{tpu_custom_call.1} parent=1 // loop_footer
      %s25 = sadd.s32 1, %s21
    $region7: #{tpu_custom_call.1} parent=1 // loop_footer_branch
      %20 = sbr.rel target = $region3
    $region8: #{tpu_custom_call.1} parent=1 // loop_exit
      _
    %692 = vsyncpa [#allocation3], 1
    %s693 = scalar_lea.sflag [#allocation3], 1
    %694 = vsyncpa %s693, 1
    %695 = vsyncpa [#allocation6], 1
    %696 = vsyncpa [#allocation9], 1
    %697 = vsyncpa [#allocation4], 1
    %s698 = scalar_lea.sflag [#allocation4], 1
    %699 = vsyncpa %s698, 1

</llo_original>
